<compile_context>
chip_gen: v5e
topology: v5e:2x2
jax: 0.10.0
libtpu: 0.0.40
codegen_flags: <defaults>
</compile_context>

<pallas_src>
import functools

import jax
import jax.numpy as jnp
from jax.experimental import pallas as pl
from jax.experimental.pallas import tpu as pltpu


# ------------------------------ kernel ------------------------------------- #

def _basic_block_kernel(x_ref, w1_ref, w2_ref, b1_ref, b2_ref, o_ref,
                        *, P, R, W, Cin, Cmid, Cout):
    """NB images per grid step; activations live as (NB*P, R*W*C) lane-dense rows."""
    NB = x_ref.shape[0]
    M = NB * P
    x2 = x_ref[...].reshape(M, R * W * Cin).astype(jnp.float32)   # reused as residual

    # Row-group index p within each image (groups of R image rows); masks for the
    # vertical halo at the top / bottom image edges (also guards image boundaries
    # inside the batched block).
    p_idx = jax.lax.broadcasted_iota(jnp.int32, (M, 1), 0) % P
    is_top = p_idx == 0
    is_bot = p_idx == P - 1

    def im2col_rows(a, c):
        """(M, R*W*c) lane-dense rows -> (M, (R+2)*W*c) rows with vertical halo."""
        wc = W * c
        z = jnp.zeros((1, a.shape[1]), jnp.float32)
        up = jnp.concatenate([z, a[:-1]], axis=0)            # up[m] = a[m-1]
        dn = jnp.concatenate([a[1:], z], axis=0)             # dn[m] = a[m+1]
        halo_top = jnp.where(is_top, 0.0, up[:, (R - 1) * wc:])   # image row p*R - 1
        halo_bot = jnp.where(is_bot, 0.0, dn[:, :wc])              # image row p*R + R
        return jnp.concatenate([halo_top, a, halo_bot], axis=1)

    # ---- conv1 (bn1 scale folded into weights) + bias + swish ----
    lhs1 = im2col_rows(x2, Cin).astype(jnp.bfloat16)
    y1 = jnp.dot(lhs1, w1_ref[...], preferred_element_type=jnp.float32)
    y1 = y1 + b1_ref[...]
    y1 = y1 * jax.nn.sigmoid(y1)                             # swish (EUP)

    # ---- conv2 (bn2 scale folded) + bias + residual + swish ----
    lhs2 = im2col_rows(y1, Cmid).astype(jnp.bfloat16)
    y2 = jnp.dot(lhs2, w2_ref[...], preferred_element_type=jnp.float32)
    y2 = y2 + b2_ref[...] + x2
    y2 = y2 * jax.nn.sigmoid(y2)

    o_ref[...] = y2.reshape(NB, P, R * W * Cout).astype(o_ref.dtype)


# ------------------------- weight preprocessing ----------------------------- #

def _band_weights(w_hwio, W, R):
    """HWIO (3,3,Cin,Cout) conv weight -> ((R+2)*W*Cin, R*W*Cout) band matrix.

    Row-group p of the output (R image rows, flattened (r,w,c)) equals LHS_p @ B,
    where LHS_p = [row p*R-1 | rows p*R..p*R+R-1 | row p*R+R] of lane-dense
    (w,c)-flattened image rows (zeros outside the image).  Left/right width-edge
    truncation (padding=1) is folded into the band matrix.
    """
    kh, kw, Cin, Cout = w_hwio.shape
    w = w_hwio.astype(jnp.float32)
    # Width band with edge truncation: w_in = w_out + kx - 1, constrained to [0, W).
    wi, wo, kx = jnp.arange(W), jnp.arange(W), jnp.arange(kw)
    S = (wi[None, :, None] == wo[None, None, :] + kx[:, None, None] - 1
         ).astype(jnp.float32)                                # (kw, W, W)
    # Vertical placement inside the (R+2)-row window: r_in = r_out + ky.
    ri, ro, ky = jnp.arange(R + kh - 1), jnp.arange(R), jnp.arange(kh)
    T = (ri[None, :, None] == ro[None, None, :] + ky[:, None, None]
         ).astype(jnp.float32)                                # (kh, R+2, R)
    B = jnp.einsum("yab,xcd,yxio->acibdo", T, S, w)           # (r_in,w_in,ci,r_out,w_out,co)
    return B.reshape((R + kh - 1) * W * Cin, R * W * Cout)


def _fold_bn(bn, eps=1e-5):
    scale = bn["gamma"] / jnp.sqrt(bn["var"] + eps)
    bias = bn["beta"] - bn["mean"] * scale
    return scale, bias


# ------------------------------ wrapper ------------------------------------- #

def basic_block_forward(x_nchw, params):
    """Fused BasicBlock forward (stride=1, downsample=None). NCHW in / NCHW out."""
    N, Cin, H, W = x_nchw.shape
    w1, w2 = params["w1"], params["w2"]                       # HWIO
    Cmid, Cout = w1.shape[-1], w2.shape[-1]
    if Cin != Cout or w1.shape[2] != Cin or w2.shape[2] != Cmid:
        # TODO(synk): stride>1 / downsample (conv1x1 + BN) branch not implemented.
        raise NotImplementedError("only stride=1, downsample=None is supported")

    # R image rows per lane-dense row so the lane dim is >= 128.
    R = 1
    while R * W * Cout < 128 and H % (2 * R) == 0:
        R *= 2
    P = H // R
    Lin, Lout = R * W * Cin, R * W * Cout

    # Images per grid step: fatten the matmul M = NB*P (largest divisor of N, M<=256).
    NB = 1
    for nb in range(1, N + 1):
        if N % nb == 0 and nb * P <= 256:
            NB = nb
    grid = (N // NB,)

    s1, b1 = _fold_bn(params["bn1"])
    s2, b2 = _fold_bn(params["bn2"])
    # BN scale folded into the banded weights; matmul operands in bf16, f32 accumulate.
    B1 = (_band_weights(w1, W, R) * jnp.tile(s1, R * W)[None, :]).astype(jnp.bfloat16)
    B2 = (_band_weights(w2, W, R) * jnp.tile(s2, R * W)[None, :]).astype(jnp.bfloat16)
    b1r = jnp.tile(b1, R * W)[None, :].astype(jnp.float32)
    b2r = jnp.tile(b2, R * W)[None, :].astype(jnp.float32)

    # NCHW -> lane-dense (N, H/R, R*W*C).
    # TODO(synk): a full ResNet would keep the lane-dense/NHWC layout end-to-end
    # and skip this transpose entirely.
    x_ld = jnp.transpose(x_nchw, (0, 2, 3, 1)).reshape(N, P, Lin)

    kernel = functools.partial(_basic_block_kernel, P=P, R=R, W=W,
                               Cin=Cin, Cmid=Cmid, Cout=Cout)

    flops = 2 * N * H * W * 9 * (Cin * Cmid + Cmid * Cout)
    bytes_accessed = (x_ld.size * 4 + N * P * Lout * 4
                      + B1.size * 2 + B2.size * 2 + (b1r.size + b2r.size) * 4)
    cost = pl.CostEstimate(flops=flops,
                           transcendentals=N * H * W * (Cmid + Cout),
                           bytes_accessed=bytes_accessed)

    out_ld = pl.pallas_call(
        kernel,
        out_shape=jax.ShapeDtypeStruct((N, P, Lout), x_nchw.dtype),
        grid=grid,
        in_specs=[
            pl.BlockSpec((NB, P, Lin), lambda n: (n, 0, 0)),
            pl.BlockSpec(B1.shape, lambda n: (0, 0)),         # grid-invariant weights
            pl.BlockSpec(B2.shape, lambda n: (0, 0)),
            pl.BlockSpec(b1r.shape, lambda n: (0, 0)),
            pl.BlockSpec(b2r.shape, lambda n: (0, 0)),
        ],
        out_specs=pl.BlockSpec((NB, P, Lout), lambda n: (n, 0, 0)),
        compiler_params=pltpu.CompilerParams(
            dimension_semantics=("parallel",),
            vmem_limit_bytes=32 * 1024 * 1024),
        cost_estimate=cost,
    )(x_ld, B1, B2, b1r, b2r)

    out = out_ld.reshape(N, H, W, Cout)
    return jnp.transpose(out, (0, 3, 1, 2))                   # -> NCHW


# -------------------------- pure-JAX reference ------------------------------ #

def _ref_forward(x_nchw, params):
    x = jnp.transpose(x_nchw, (0, 2, 3, 1))

    def conv(a, w):
        return jax.lax.conv_general_dilated(
            a, w, (1, 1), ((1, 1), (1, 1)),
            dimension_numbers=("NHWC", "HWIO", "NHWC"))

    s1, b1 = _fold_bn(params["bn1"])
    s2, b2 = _fold_bn(params["bn2"])
    y = conv(x, params["w1"]) * s1 + b1
    y = y * jax.nn.sigmoid(y)
    y = conv(y, params["w2"]) * s2 + b2
    y = y + x
    y = y * jax.nn.sigmoid(y)
    return jnp.transpose(y, (0, 3, 1, 2))


# --------------------------------- main ------------------------------------- #

if __name__ == "__main__":
    N, inplanes, planes, H, W = 2, 4, 4, 16, 16   # stride=1, downsample=None

    key = jax.random.PRNGKey(0)
    kx_, kw1, kw2, kg1, kb1, kg2, kb2, km1, kv1, km2, kv2 = jax.random.split(key, 11)

    x = jax.random.normal(kx_, (N, inplanes, H, W), jnp.float32)

    # conv weights: PyTorch OIHW -> HWIO
    w1 = jnp.transpose(
        0.2 * jax.random.normal(kw1, (planes, inplanes, 3, 3), jnp.float32),
        (2, 3, 1, 0))
    w2 = jnp.transpose(
        0.2 * jax.random.normal(kw2, (planes, planes, 3, 3), jnp.float32),
        (2, 3, 1, 0))

    def make_bn(kg, kb, km, kv):
        return {
            "gamma": 1.0 + 0.1 * jax.random.normal(kg, (planes,), jnp.float32),
            "beta": 0.1 * jax.random.normal(kb, (planes,), jnp.float32),
            "mean": 0.05 * jax.random.normal(km, (planes,), jnp.float32),
            "var": 1.0 + 0.1 * jnp.abs(jax.random.normal(kv, (planes,), jnp.float32)),
        }

    params = {
        "w1": w1, "w2": w2,
        "bn1": make_bn(kg1, kb1, km1, kv1),
        "bn2": make_bn(kg2, kb2, km2, kv2),
    }

    out = jax.block_until_ready(basic_block_forward(x, params))
    ref = jax.block_until_ready(_ref_forward(x, params))

    assert out.shape == (N, planes, H, W), out.shape
    # bf16 matmul operands (f32 accumulate): tolerance loosened vs. the f32 XLA
    # conv reference, per the performance review.
    assert jnp.allclose(out, ref, atol=5e-2, rtol=5e-2), float(
        jnp.max(jnp.abs(out - ref)))

    print("KERNEL_OK")
</pallas_src>

<mosaic_0001>
module attributes {stable_mosaic.version = 11 : i64} {
  func.func @_basic_block_kernel(%arg0: i32, %arg1: memref<2x8x128xf32, #tpu.memory_space<vmem>>, %arg2: memref<256x128xbf16, #tpu.memory_space<vmem>>, %arg3: memref<256x128xbf16, #tpu.memory_space<vmem>>, %arg4: memref<1x128xf32, #tpu.memory_space<vmem>>, %arg5: memref<1x128xf32, #tpu.memory_space<vmem>>, %arg6: memref<2x8x128xf32, #tpu.memory_space<vmem>>) attributes {dimension_semantics = [#tpu.dimension_semantics<parallel>], iteration_bounds = array<i64: 1>, scalar_prefetch = 0 : i64, scratch_operands = 0 : i64, tpu.core_type = #tpu.core_type<tc>, window_params = [{transform_indices = @transform_0, window_bounds = array<i64: 2, 8, 128>}, {pipeline_mode = #tpu.pipeline_mode<synchronous>, transform_indices = @transform_1, window_bounds = array<i64: 256, 128>}, {pipeline_mode = #tpu.pipeline_mode<synchronous>, transform_indices = @transform_2, window_bounds = array<i64: 256, 128>}, {pipeline_mode = #tpu.pipeline_mode<synchronous>, transform_indices = @transform_3, window_bounds = array<i64: 1, 128>}, {pipeline_mode = #tpu.pipeline_mode<synchronous>, transform_indices = @transform_4, window_bounds = array<i64: 1, 128>}, {transform_indices = @transform_5, window_bounds = array<i64: 2, 8, 128>}]} {
    %c0 = arith.constant 0 : index
    %c0_0 = arith.constant 0 : index
    %c0_1 = arith.constant 0 : index
    %0 = vector.load %arg1[%c0, %c0_0, %c0_1] : memref<2x8x128xf32, #tpu.memory_space<vmem>>, vector<2x8x128xf32>
    %1 = vector.shape_cast %0 : vector<2x8x128xf32> to vector<16x128xf32>
    %2 = tpu.iota {dimensions = array<i32: 0>} : vector<16x1xi32>
    %c8_i32 = arith.constant 8 : i32
    %c0_i32 = arith.constant 0 : i32
    %3 = arith.cmpi eq, %c8_i32, %c0_i32 : i32
    %c1_i32 = arith.constant 1 : i32
    %4 = arith.select %3, %c1_i32, %c8_i32 : i32
    %5 = vector.broadcast %4 : i32 to vector<16x1xi32>
    %6 = arith.remsi %2, %5 : vector<16x1xi32>
    %c0_i32_2 = arith.constant 0 : i32
    %7 = vector.broadcast %c0_i32_2 : i32 to vector<16x1xi32>
    %8 = arith.cmpi ne, %6, %7 : vector<16x1xi32>
    %c0_i32_3 = arith.constant 0 : i32
    %9 = vector.broadcast %c0_i32_3 : i32 to vector<16x1xi32>
    %10 = arith.cmpi slt, %6, %9 : vector<16x1xi32>
    %c0_i32_4 = arith.constant 0 : i32
    %11 = arith.cmpi slt, %4, %c0_i32_4 : i32
    %12 = vector.broadcast %11 : i1 to vector<16x1xi1>
    %13 = vector.broadcast %12 : vector<16x1xi1> to vector<16x1xi1>
    %14 = arith.xori %10, %13 : vector<16x1xi1>
    %15 = arith.andi %14, %8 : vector<16x1xi1>
    %16 = vector.broadcast %4 : i32 to vector<16x1xi32>
    %17 = arith.addi %6, %16 : vector<16x1xi32>
    %18 = arith.select %15, %17, %6 : vector<16x1xi1>, vector<16x1xi32>
    %c0_i32_5 = arith.constant 0 : i32
    %19 = vector.broadcast %c0_i32_5 : i32 to vector<16x1xi32>
    %20 = arith.cmpi eq, %18, %19 : vector<16x1xi32>
    %c7_i32 = arith.constant 7 : i32
    %21 = vector.broadcast %c7_i32 : i32 to vector<16x1xi32>
    %22 = arith.cmpi eq, %18, %21 : vector<16x1xi32>
    %cst = arith.constant 0.000000e+00 : f32
    %23 = vector.broadcast %cst : f32 to vector<1x128xf32>
    %24 = vector.extract_strided_slice %1 {offsets = [0, 0], sizes = [15, 128], strides = [1, 1]} : vector<16x128xf32> to vector<15x128xf32>
    %25 = tpu.concatenate %23, %24 in 0 : vector<1x128xf32>, vector<15x128xf32> -> vector<16x128xf32>
    %26 = vector.extract_strided_slice %1 {offsets = [1, 0], sizes = [15, 128], strides = [1, 1]} : vector<16x128xf32> to vector<15x128xf32>
    %27 = tpu.concatenate %26, %23 in 0 : vector<15x128xf32>, vector<1x128xf32> -> vector<16x128xf32>
    %28 = vector.extract_strided_slice %25 {offsets = [0, 64], sizes = [16, 64], strides = [1, 1]} : vector<16x128xf32> to vector<16x64xf32>
    %cst_6 = arith.constant 0.000000e+00 : f32
    %29 = vector.shape_cast %20 : vector<16x1xi1> to vector<16x1xi1>
    %30 = vector.broadcast %29 : vector<16x1xi1> to vector<16x64xi1>
    %31 = vector.broadcast %cst_6 : f32 to vector<16x64xf32>
    %32 = arith.select %30, %31, %28 : vector<16x64xi1>, vector<16x64xf32>
    %33 = vector.extract_strided_slice %27 {offsets = [0, 0], sizes = [16, 64], strides = [1, 1]} : vector<16x128xf32> to vector<16x64xf32>
    %cst_7 = arith.constant 0.000000e+00 : f32
    %34 = vector.shape_cast %22 : vector<16x1xi1> to vector<16x1xi1>
    %35 = vector.broadcast %34 : vector<16x1xi1> to vector<16x64xi1>
    %36 = vector.broadcast %cst_7 : f32 to vector<16x64xf32>
    %37 = arith.select %35, %36, %33 : vector<16x64xi1>, vector<16x64xf32>
    %38 = tpu.concatenate %32, %1, %37 in 1 : vector<16x64xf32>, vector<16x128xf32>, vector<16x64xf32> -> vector<16x256xf32>
    %39 = arith.truncf %38 : vector<16x256xf32> to vector<16x256xbf16>
    %c0_8 = arith.constant 0 : index
    %c0_9 = arith.constant 0 : index
    %40 = vector.load %arg2[%c0_8, %c0_9] : memref<256x128xbf16, #tpu.memory_space<vmem>>, vector<256x128xbf16>
    %cst_10 = arith.constant dense<0.000000e+00> : vector<16x128xf32>
    %41 = tpu.matmul %39, %40, %cst_10 {dimension_numbers = #tpu.dot_dimension_numbers<[1], [0], [0], [1], [0, 0, 1, 1], [], []>} : vector<16x256xbf16>, vector<256x128xbf16>, vector<16x128xf32> -> vector<16x128xf32>
    %c0_11 = arith.constant 0 : index
    %c0_12 = arith.constant 0 : index
    %42 = vector.load %arg4[%c0_11, %c0_12] : memref<1x128xf32, #tpu.memory_space<vmem>>, vector<1x128xf32>
    %43 = vector.broadcast %42 : vector<1x128xf32> to vector<16x128xf32>
    %44 = arith.addf %41, %43 : vector<16x128xf32>
    %45 = arith.negf %44 : vector<16x128xf32>
    %46 = math.exp %45 : vector<16x128xf32>
    %cst_13 = arith.constant 1.000000e+00 : f32
    %47 = vector.broadcast %cst_13 : f32 to vector<16x128xf32>
    %48 = arith.addf %47, %46 : vector<16x128xf32>
    %49 = arith.divf %47, %48 : vector<16x128xf32>
    %50 = arith.mulf %44, %49 : vector<16x128xf32>
    %cst_14 = arith.constant 0.000000e+00 : f32
    %51 = vector.broadcast %cst_14 : f32 to vector<1x128xf32>
    %52 = vector.extract_strided_slice %50 {offsets = [0, 0], sizes = [15, 128], strides = [1, 1]} : vector<16x128xf32> to vector<15x128xf32>
    %53 = tpu.concatenate %51, %52 in 0 : vector<1x128xf32>, vector<15x128xf32> -> vector<16x128xf32>
    %54 = vector.extract_strided_slice %50 {offsets = [1, 0], sizes = [15, 128], strides = [1, 1]} : vector<16x128xf32> to vector<15x128xf32>
    %55 = tpu.concatenate %54, %51 in 0 : vector<15x128xf32>, vector<1x128xf32> -> vector<16x128xf32>
    %56 = vector.extract_strided_slice %53 {offsets = [0, 64], sizes = [16, 64], strides = [1, 1]} : vector<16x128xf32> to vector<16x64xf32>
    %cst_15 = arith.constant 0.000000e+00 : f32
    %57 = vector.shape_cast %20 : vector<16x1xi1> to vector<16x1xi1>
    %58 = vector.broadcast %57 : vector<16x1xi1> to vector<16x64xi1>
    %59 = vector.broadcast %cst_15 : f32 to vector<16x64xf32>
    %60 = arith.select %58, %59, %56 : vector<16x64xi1>, vector<16x64xf32>
    %61 = vector.extract_strided_slice %55 {offsets = [0, 0], sizes = [16, 64], strides = [1, 1]} : vector<16x128xf32> to vector<16x64xf32>
    %cst_16 = arith.constant 0.000000e+00 : f32
    %62 = vector.shape_cast %22 : vector<16x1xi1> to vector<16x1xi1>
    %63 = vector.broadcast %62 : vector<16x1xi1> to vector<16x64xi1>
    %64 = vector.broadcast %cst_16 : f32 to vector<16x64xf32>
    %65 = arith.select %63, %64, %61 : vector<16x64xi1>, vector<16x64xf32>
    %66 = tpu.concatenate %60, %50, %65 in 1 : vector<16x64xf32>, vector<16x128xf32>, vector<16x64xf32> -> vector<16x256xf32>
    %67 = arith.truncf %66 : vector<16x256xf32> to vector<16x256xbf16>
    %c0_17 = arith.constant 0 : index
    %c0_18 = arith.constant 0 : index
    %68 = vector.load %arg3[%c0_17, %c0_18] : memref<256x128xbf16, #tpu.memory_space<vmem>>, vector<256x128xbf16>
    %cst_19 = arith.constant dense<0.000000e+00> : vector<16x128xf32>
    %69 = tpu.matmul %67, %68, %cst_19 {dimension_numbers = #tpu.dot_dimension_numbers<[1], [0], [0], [1], [0, 0, 1, 1], [], []>} : vector<16x256xbf16>, vector<256x128xbf16>, vector<16x128xf32> -> vector<16x128xf32>
    %c0_20 = arith.constant 0 : index
    %c0_21 = arith.constant 0 : index
    %70 = vector.load %arg5[%c0_20, %c0_21] : memref<1x128xf32, #tpu.memory_space<vmem>>, vector<1x128xf32>
    %71 = vector.broadcast %70 : vector<1x128xf32> to vector<16x128xf32>
    %72 = arith.addf %69, %71 : vector<16x128xf32>
    %73 = arith.addf %72, %1 : vector<16x128xf32>
    %74 = arith.negf %73 : vector<16x128xf32>
    %75 = math.exp %74 : vector<16x128xf32>
    %cst_22 = arith.constant 1.000000e+00 : f32
    %76 = vector.broadcast %cst_22 : f32 to vector<16x128xf32>
    %77 = arith.addf %76, %75 : vector<16x128xf32>
    %78 = arith.divf %76, %77 : vector<16x128xf32>
    %79 = arith.mulf %73, %78 : vector<16x128xf32>
    %80 = vector.shape_cast %79 : vector<16x128xf32> to vector<2x8x128xf32>
    %c0_23 = arith.constant 0 : index
    %c0_24 = arith.constant 0 : index
    %c0_25 = arith.constant 0 : index
    %81 = vector.load %arg6[%c0_23, %c0_24, %c0_25] : memref<2x8x128xf32, #tpu.memory_space<vmem>>, vector<2x8x128xf32>
    tpu.vector_store %arg6[%c0_23, %c0_24, %c0_25], %80 {strides = array<i32>} : memref<2x8x128xf32, #tpu.memory_space<vmem>>, vector<2x8x128xf32>,
    return
  }
  func.func @transform_0(%arg0: i32) -> (i32, i32, i32) {
    %c0_i32 = arith.constant 0 : i32
    %c0_i32_0 = arith.constant 0 : i32
    %c0_i32_1 = arith.constant 0 : i32
    return %arg0, %c0_i32, %c0_i32_0 : i32, i32, i32
  }
  func.func @transform_1(%arg0: i32) -> (i32, i32) {
    %c0_i32 = arith.constant 0 : i32
    %c0_i32_0 = arith.constant 0 : i32
    %c0_i32_1 = arith.constant 0 : i32
    return %c0_i32, %c0_i32_0 : i32, i32
  }
  func.func @transform_2(%arg0: i32) -> (i32, i32) {
    %c0_i32 = arith.constant 0 : i32
    %c0_i32_0 = arith.constant 0 : i32
    %c0_i32_1 = arith.constant 0 : i32
    return %c0_i32, %c0_i32_0 : i32, i32
  }
  func.func @transform_3(%arg0: i32) -> (i32, i32) {
    %c0_i32 = arith.constant 0 : i32
    %c0_i32_0 = arith.constant 0 : i32
    %c0_i32_1 = arith.constant 0 : i32
    return %c0_i32, %c0_i32_0 : i32, i32
  }
  func.func @transform_4(%arg0: i32) -> (i32, i32) {
    %c0_i32 = arith.constant 0 : i32
    %c0_i32_0 = arith.constant 0 : i32
    %c0_i32_1 = arith.constant 0 : i32
    return %c0_i32, %c0_i32_0 : i32, i32
  }
  func.func @transform_5(%arg0: i32) -> (i32, i32, i32) {
    %c0_i32 = arith.constant 0 : i32
    %c0_i32_0 = arith.constant 0 : i32
    %c0_i32_1 = arith.constant 0 : i32
    return %arg0, %c0_i32, %c0_i32_0 : i32, i32, i32
  }
}

</mosaic_0001>

<llo_original>
// kernel: tpu_custom_call.1
$region0: #{tpu_custom_call.1}
  #allocation0 [shape = 'u32[]', space=smem, size = 0x4, offset = 0x4, fixed_abs, tag = 'smem constant byte address 0x4 - core index']
  #allocation1 [shape = 'u32[72,128]{1,0:T(1,128)}', space=vmem, size = 0x9000, scoped, tag = 'internal scratch']
  %s0 = inlined_call_operand.hbm [shape: f32[2,8,128], index: 0, kind: input, shape index: {}]
  %s1 = inlined_call_operand.hbm [shape: bf16[256,128], index: 1, kind: input, shape index: {}]
  %s2 = inlined_call_operand.hbm [shape: bf16[256,128], index: 2, kind: input, shape index: {}]
  %s3 = inlined_call_operand.vmem [shape: f32[1,128], index: 3, kind: input, shape index: {}]
  %s4 = inlined_call_operand.vmem [shape: f32[1,128], index: 4, kind: input, shape index: {}]
  %s5 = inlined_call_operand.hbm [shape: f32[2,8,128], index: 5, kind: output, shape index: {}]
  %s6 = sld [smem:[#allocation0]]
  $region42: #{tpu_custom_call.1} parent=0
    _
  %s8 = ssub.s32 1, %s6
  %s9 = scalar_select 0, %s8, %s6
  $region1: #{tpu_custom_call.1} parent=0
    #allocation2 [shape = 'u8[8192]{0}', space=vmem, size = 0x2000, scoped, tag = 'input window, operand 0, single buffered']
    #allocation3 [shape = 's32[1]{0}', space=sflag, size = 0x4, scoped, tag = 'scoped memory for tpu_custom_call.1']
    #allocation4 [shape = 's32[1]{0}', space=sflag, size = 0x4, scoped, tag = 'scoped memory for tpu_custom_call.1']
    #allocation5 [shape = 'u8[65536]{0}', space=vmem, size = 0x10000, scoped, tag = 'input window, operand 1, single buffered']
    #allocation6 [shape = 's32[1]{0}', space=sflag, size = 0x4, scoped, tag = 'scoped memory for tpu_custom_call.1']
    #allocation7 [shape = 'u8[65536]{0}', space=vmem, size = 0x10000, scoped, tag = 'input window, operand 2, single buffered']
    #allocation8 [shape = 'u8[8192]{0}', space=vmem, size = 0x2000, scoped, tag = 'output window, operand 0, single buffered']
    %10 = vsyncpa [#allocation3], 0
    %11 = vsyncpa [#allocation6], 0
    %12 = vsyncpa [#allocation4], 0
    // Predicated region
    $region2: #{tpu_custom_call.1} parent=1 // pred_check
      _
    $region3: #{tpu_custom_call.1} parent=1 // pred_check_branch
      %14 = sbr.rel (0) target = $region5
    $region4: #{tpu_custom_call.1} parent=1 // pred_region
      %16 = vsyncadd [#allocation3], 0
      %s17 = sshll.u32 %s0, 4
      %s18 = int_to_ptr.hbm [resolvable:$true] %s17
      %s19 = sshll.u32 [#allocation2], 4
      %s20 = int_to_ptr.vmem [resolvable:$true] %s19
      %25 = dma.hbm_to_vmem [thread:$0]  %s18, 256, %s20, [#allocation3], 128, 128, 8
    $region5: #{tpu_custom_call.1} parent=1 // pred_fallthru
      _
    // Predicated region
    $region6: #{tpu_custom_call.1} parent=1 // pred_check
      _
    $region7: #{tpu_custom_call.1} parent=1 // pred_check_branch
      %27 = sbr.rel (0) target = $region9
    $region8: #{tpu_custom_call.1} parent=1 // pred_region
      %29 = vsyncadd [#allocation6], 0
      %s30 = sshll.u32 %s1, 4
      %s31 = int_to_ptr.hbm [resolvable:$true] %s30
      %s32 = sshll.u32 [#allocation5], 4
      %s33 = int_to_ptr.vmem [resolvable:$true] %s32
      %38 = dma.hbm_to_vmem [thread:$0]  %s31, 2048, %s33, [#allocation6], 64, 64, 4
    $region9: #{tpu_custom_call.1} parent=1 // pred_fallthru
      _
    // Predicated region
    $region10: #{tpu_custom_call.1} parent=1 // pred_check
      _
    $region11: #{tpu_custom_call.1} parent=1 // pred_check_branch
      %40 = sbr.rel (0) target = $region13
    $region12: #{tpu_custom_call.1} parent=1 // pred_region
      %42 = vsyncadd [#allocation6], 0
      %s43 = sshll.u32 %s2, 4
      %s44 = int_to_ptr.hbm [resolvable:$true] %s43
      %s45 = sshll.u32 [#allocation7], 4
      %s46 = int_to_ptr.vmem [resolvable:$true] %s45
      %51 = dma.hbm_to_vmem [thread:$0]  %s44, 2048, %s46, [#allocation6], 64, 64, 4
    $region13: #{tpu_custom_call.1} parent=1 // pred_fallthru
      _
    // Predicated region
    $region14: #{tpu_custom_call.1} parent=1 // pred_check
      _
    $region15: #{tpu_custom_call.1} parent=1 // pred_check_branch
      %53 = sbr.rel (0) target = $region17
    $region16: #{tpu_custom_call.1} parent=1 // pred_region
      _
    $region17: #{tpu_custom_call.1} parent=1 // pred_fallthru
      _
    // Predicated region
    $region18: #{tpu_custom_call.1} parent=1 // pred_check
      _
    $region19: #{tpu_custom_call.1} parent=1 // pred_check_branch
      %55 = sbr.rel (0) target = $region21
    $region20: #{tpu_custom_call.1} parent=1 // pred_region
      _
    $region21: #{tpu_custom_call.1} parent=1 // pred_fallthru
      _
    // Predicated region
    $region22: #{tpu_custom_call.1} parent=1 // pred_check
      _
    $region23: #{tpu_custom_call.1} parent=1 // pred_check_branch
      %57 = sbr.rel (0) target = $region25
    $region24: #{tpu_custom_call.1} parent=1 // pred_region
      %59 = dma.done [#allocation3], 256
    $region25: #{tpu_custom_call.1} parent=1 // pred_fallthru
      _
    // Predicated region
    $region26: #{tpu_custom_call.1} parent=1 // pred_check
      _
    $region27: #{tpu_custom_call.1} parent=1 // pred_check_branch
      %61 = sbr.rel (0) target = $region29
    $region28: #{tpu_custom_call.1} parent=1 // pred_region
      %63 = dma.done [#allocation6], 2048
    $region29: #{tpu_custom_call.1} parent=1 // pred_fallthru
      _
    // Predicated region
    $region30: #{tpu_custom_call.1} parent=1 // pred_check
      _
    $region31: #{tpu_custom_call.1} parent=1 // pred_check_branch
      %65 = sbr.rel (0) target = $region33
    $region32: #{tpu_custom_call.1} parent=1 // pred_region
      %67 = dma.done [#allocation6], 2048
    $region33: #{tpu_custom_call.1} parent=1 // pred_fallthru
      _
    %v68 = vld [vmem:[#allocation2] sm:$0xff]
    %v69 = vld [vmem:[#allocation2 + $0x8] sm:$0xff]
    %v70 = vlaneseq
    %v71 = vshrl.u32 %v70, 7
    %v72 = vadd.s32 %v71, 8
    %vm73 = vcmp.lt.s32.totalorder %v71, 0
    %v74 = vsub.s32 0, %v71
    %v75 = vsel %vm73, %v74, %v71
    %v76 = vshrl.u32 %v75, 3
    %v77 = vand.u32 %v75, 7
    %v78 = vsub.s32 0, %v77
    %v79 = vsel %vm73, %v78, %v77
    %vm80 = vcmp.lt.s32.totalorder %v72, 0
    %v81 = vsub.s32 0, %v72
    %v82 = vsel %vm80, %v81, %v72
    %v83 = vshrl.u32 %v82, 3
    %v84 = vand.u32 %v82, 7
    %v85 = vsub.s32 0, %v84
    %v86 = vsel %vm80, %v85, %v84
    %vm87 = vcmp.ne.s32.totalorder %v79, 0
    %vm88 = vcmp.ne.s32.totalorder %v86, 0
    %vm89 = vcmp.lt.s32.totalorder %v79, 0
    %vm90 = vcmp.lt.s32.totalorder %v86, 0
    %vm91 = vmand %vm89, %vm87
    %vm92 = vmand %vm90, %vm88
    %v93 = vadd.s32 %v79, 8
    %v94 = vadd.s32 %v86, 8
    %v95 = vsel %vm91, %v93, %v79
    %v96 = vsel %vm92, %v94, %v86
    %vm97 = vcmp.eq.s32.totalorder %v95, 0
    %vm98 = vcmp.eq.s32.totalorder %v96, 0
    %vm99 = vcmp.eq.s32.totalorder %v95, 7
    %vm100 = vcmp.eq.s32.totalorder %v96, 7
    %vm103 = vcmask 1040384
    %v104 = vrot.slane %v68, 7
    %v105 = vrot.slane %v69, 7
    %v106 = vsel %vm103, %v104, %v105
    %v109 = vsel %vm103, 0.0, %v104
    %vm110 = vcmask 1046528
    %v111 = vrot.slane %v68, 1
    %v112 = vrot.slane %v69, 1
    %v113 = vsel %vm110, %v111, %v112
    %v116 = vsel %vm110, %v112, 0.0
    %v117 = vsel %vm97, 1, 0
    %v118 = vsel %vm98, 1, 0
    %vm119 = vcmp.eq.s32.totalorder %v117, 1
    %vm120 = vcmp.eq.s32.totalorder %v118, 1
    %v121 = vsel %vm119, 0.0, %v109
    %v122 = vsel %vm120, 0.0, %v106
    %v123 = vsel %vm99, 1, 0
    %v124 = vsel %vm100, 1, 0
    %vm125 = vcmp.eq.s32.totalorder %v123, 1
    %vm126 = vcmp.eq.s32.totalorder %v124, 1
    %v127 = vsel %vm125, 0.0, %v113
    %v128 = vsel %vm126, 0.0, %v116
    %131 = vrot.lane.b32.xlu0 %v121, 64
    %v132 = vpop.permute.xlu0 %131
    %133 = vrot.lane.b32.xlu0 %v122, 64
    %v134 = vpop.permute.xlu0 %133
    %137 = vrot.lane.b32.xlu0 %v68, 64
    %v138 = vpop.permute.xlu0 %137
    %139 = vrot.lane.b32.xlu0 %v69, 64
    %v140 = vpop.permute.xlu0 %139
    %145 = vrot.lane.b32.xlu0 %v127, 64
    %v146 = vpop.permute.xlu0 %145
    %147 = vrot.lane.b32.xlu0 %v128, 64
    %v148 = vpop.permute.xlu0 %147
    %vm151 = vcmask 523264
    %v152 = vsel %vm151, %v132, %v138
    %v153 = vsel %vm151, %v134, %v140
    %v154 = vsel %vm151, %v138, %v146
    %v155 = vsel %vm151, %v140, %v148
    %v156 = vpack.c.bf16 %v153, %v152
    %v157 = vpack.c.bf16 %v155, %v154
    %v158 = vld [vmem:[#allocation5] sm:$0xf]
    %v159 = vld [vmem:[#allocation5 + $0x4] sm:$0xf]
    %v160 = vld [vmem:[#allocation5 + $0x8] sm:$0xf]
    %v161 = vld [vmem:[#allocation5 + $0xc] sm:$0xf]
    %v162 = vld [vmem:[#allocation5 + $0x10] sm:$0xf]
    %v163 = vld [vmem:[#allocation5 + $0x14] sm:$0xf]
    %v164 = vld [vmem:[#allocation5 + $0x18] sm:$0xf]
    %v165 = vld [vmem:[#allocation5 + $0x1c] sm:$0xf]
    %v166 = vld [vmem:[#allocation5 + $0x20] sm:$0xf]
    %v167 = vld [vmem:[#allocation5 + $0x24] sm:$0xf]
    %v168 = vld [vmem:[#allocation5 + $0x28] sm:$0xf]
    %v169 = vld [vmem:[#allocation5 + $0x2c] sm:$0xf]
    %v170 = vld [vmem:[#allocation5 + $0x30] sm:$0xf]
    %v171 = vld [vmem:[#allocation5 + $0x34] sm:$0xf]
    %v172 = vld [vmem:[#allocation5 + $0x38] sm:$0xf]
    %v173 = vld [vmem:[#allocation5 + $0x3c] sm:$0xf]
    %v174 = vld [vmem:[#allocation5 + $0x40] sm:$0xf]
    %v175 = vld [vmem:[#allocation5 + $0x44] sm:$0xf]
    %v176 = vld [vmem:[#allocation5 + $0x48] sm:$0xf]
    %v177 = vld [vmem:[#allocation5 + $0x4c] sm:$0xf]
    %v178 = vld [vmem:[#allocation5 + $0x50] sm:$0xf]
    %v179 = vld [vmem:[#allocation5 + $0x54] sm:$0xf]
    %v180 = vld [vmem:[#allocation5 + $0x58] sm:$0xf]
    %v181 = vld [vmem:[#allocation5 + $0x5c] sm:$0xf]
    %v182 = vld [vmem:[#allocation5 + $0x60] sm:$0xf]
    %v183 = vld [vmem:[#allocation5 + $0x64] sm:$0xf]
    %v184 = vld [vmem:[#allocation5 + $0x68] sm:$0xf]
    %v185 = vld [vmem:[#allocation5 + $0x6c] sm:$0xf]
    %v186 = vld [vmem:[#allocation5 + $0x70] sm:$0xf]
    %v187 = vld [vmem:[#allocation5 + $0x74] sm:$0xf]
    %v188 = vld [vmem:[#allocation5 + $0x78] sm:$0xf]
    %v189 = vld [vmem:[#allocation5 + $0x7c] sm:$0xf]
    %v190 = vld [vmem:[%s3] sm:$0x1]
    %v192 = vperm.slane %v190, 0
    %v226 = vunpack.c.l.b16 %v158
    %v227 = vunpack.c.l.b16 %v159
    %v228 = vunpack.c.l.b16 %v160
    %v229 = vunpack.c.l.b16 %v161
    %v230 = vunpack.c.l.b16 %v162
    %v231 = vunpack.c.l.b16 %v163
    %v232 = vunpack.c.l.b16 %v164
    %v233 = vunpack.c.l.b16 %v165
    %v234 = vunpack.c.l.b16 %v166
    %v235 = vunpack.c.l.b16 %v167
    %v236 = vunpack.c.l.b16 %v168
    %v237 = vunpack.c.l.b16 %v169
    %v238 = vunpack.c.l.b16 %v170
    %v239 = vunpack.c.l.b16 %v171
    %v240 = vunpack.c.l.b16 %v172
    %v241 = vunpack.c.l.b16 %v173
    %v242 = vunpack.c.l.b16 %v174
    %v243 = vunpack.c.l.b16 %v175
    %v244 = vunpack.c.l.b16 %v176
    %v245 = vunpack.c.l.b16 %v177
    %v246 = vunpack.c.l.b16 %v178
    %v247 = vunpack.c.l.b16 %v179
    %v248 = vunpack.c.l.b16 %v180
    %v249 = vunpack.c.l.b16 %v181
    %v250 = vunpack.c.l.b16 %v182
    %v251 = vunpack.c.l.b16 %v183
    %v252 = vunpack.c.l.b16 %v184
    %v253 = vunpack.c.l.b16 %v185
    %v254 = vunpack.c.l.b16 %v186
    %v255 = vunpack.c.l.b16 %v187
    %v256 = vunpack.c.l.b16 %v188
    %v257 = vunpack.c.l.b16 %v189
    %v258 = vpack.c.b16 %v227, %v226
    %v259 = vpack.c.b16 %v229, %v228
    %v260 = vpack.c.b16 %v231, %v230
    %v261 = vpack.c.b16 %v233, %v232
    %v262 = vpack.c.b16 %v235, %v234
    %v263 = vpack.c.b16 %v237, %v236
    %v264 = vpack.c.b16 %v239, %v238
    %v265 = vpack.c.b16 %v241, %v240
    %v266 = vpack.c.b16 %v243, %v242
    %v267 = vpack.c.b16 %v245, %v244
    %v268 = vpack.c.b16 %v247, %v246
    %v269 = vpack.c.b16 %v249, %v248
    %v270 = vpack.c.b16 %v251, %v250
    %v271 = vpack.c.b16 %v253, %v252
    %v272 = vpack.c.b16 %v255, %v254
    %v273 = vpack.c.b16 %v257, %v256
    %290 = vmatpush.bf16.msra.mxu0 %v265
    %291 = vmatpush.bf16.msra.mxu0 %v264
    %292 = vmatpush.bf16.msra.mxu0 %v263
    %293 = vmatpush.bf16.msra.mxu0 %v262
    %294 = vmatpush.bf16.msra.mxu0 %v261
    %295 = vmatpush.bf16.msra.mxu0 %v260
    %296 = vmatpush.bf16.msra.mxu0 %v259
    %297 = vmatpush.bf16.msra.mxu0 %v258
    %298 = vmatmul.bf16.gmra.mxu0 %v156
    %v299 = vpop.f32.mrf.mxu0
    %v300 = vadd.f32 %v192, %v299
    %v301 = vpop.f32.mrf.mxu0
    %v302 = vadd.f32 %v192, %v301
    %303 = vdwg.mxu0
    %304 = vmatpush.bf16.msra.mxu0 %v273
    %305 = vmatpush.bf16.msra.mxu0 %v272
    %306 = vmatpush.bf16.msra.mxu0 %v271
    %307 = vmatpush.bf16.msra.mxu0 %v270
    %308 = vmatpush.bf16.msra.mxu0 %v269
    %309 = vmatpush.bf16.msra.mxu0 %v268
    %310 = vmatpush.bf16.msra.mxu0 %v267
    %311 = vmatpush.bf16.msra.mxu0 %v266
    %312 = vmatmul.bf16.gmra.mxu0 %v157
    %v313 = vpop.f32.mrf.mxu0
    %v314 = vadd.f32 %v300, %v313
    %v315 = vpop.f32.mrf.mxu0
    %v316 = vadd.f32 %v302, %v315
    %317 = vdwg.mxu0
    %v318 = vxor.u32 %v314, 2147483648
    %v319 = vxor.u32 %v316, 2147483648
    %v320 = vmul.f32 %v318, 1.442695
    %v321 = vpow.pop %v320
    %v322 = vmul.f32 %v319, 1.442695
    %v323 = vpow.pop %v322
    %v324 = vadd.f32 %v321, 1.0
    %v325 = vadd.f32 %v323, 1.0
    %v326 = vrcp.pop %v324
    %v327 = vmul.f32 %v324, %v326
    %v328 = vsub.f32 1.0, %v327
    %v329 = vmul.f32 %v326, %v328
    %v330 = vadd.f32 %v326, %v329
    %vm331 = vweird.f32 %v324
    %vm332 = vweird.f32 %v326
    %vm333 = vmor %vm331, %vm332
    %v334 = vsel %vm333, %v326, %v330
    %v335 = vand.u32 2147483647, %v324
    %vm336 = vcmp.eq.f32.partialorder %v335, 8.507059e+37
    %v337 = vand.u32 %v324, 2147483648
    %v338 = vor.u32 1.1754944e-38, %v337
    %v339 = vsel %vm336, %v338, %v334
    %v340 = vmul.f32 1.0, %v339
    %v341 = vrcp.pop %v325
    %v342 = vmul.f32 %v325, %v341
    %v343 = vsub.f32 1.0, %v342
    %v344 = vmul.f32 %v341, %v343
    %v345 = vadd.f32 %v341, %v344
    %vm346 = vweird.f32 %v325
    %vm347 = vweird.f32 %v341
    %vm348 = vmor %vm346, %vm347
    %v349 = vsel %vm348, %v341, %v345
    %v350 = vand.u32 2147483647, %v325
    %vm351 = vcmp.eq.f32.partialorder %v350, 8.507059e+37
    %v352 = vand.u32 %v325, 2147483648
    %v353 = vor.u32 1.1754944e-38, %v352
    %v354 = vsel %vm351, %v353, %v349
    %v355 = vmul.f32 1.0, %v354
    %v356 = vmul.f32 %v314, %v340
    %v357 = vmul.f32 %v316, %v355
    %v360 = vrot.slane %v356, 7
    %v361 = vrot.slane %v357, 7
    %v362 = vsel %vm103, %v360, %v361
    %v365 = vsel %vm103, 0.0, %v360
    %v366 = vrot.slane %v356, 1
    %v367 = vrot.slane %v357, 1
    %v368 = vsel %vm110, %v366, %v367
    %v371 = vsel %vm110, %v367, 0.0
    %v372 = vsel %vm119, 0.0, %v365
    %v373 = vsel %vm120, 0.0, %v362
    %v374 = vsel %vm125, 0.0, %v368
    %v375 = vsel %vm126, 0.0, %v371
    %378 = vrot.lane.b32.xlu0 %v372, 64
    %v379 = vpop.permute.xlu0 %378
    %380 = vrot.lane.b32.xlu0 %v373, 64
    %v381 = vpop.permute.xlu0 %380
    %384 = vrot.lane.b32.xlu0 %v356, 64
    %v385 = vpop.permute.xlu0 %384
    %386 = vrot.lane.b32.xlu0 %v357, 64
    %v387 = vpop.permute.xlu0 %386
    %392 = vrot.lane.b32.xlu0 %v374, 64
    %v393 = vpop.permute.xlu0 %392
    %394 = vrot.lane.b32.xlu0 %v375, 64
    %v395 = vpop.permute.xlu0 %394
    %v398 = vsel %vm151, %v379, %v385
    %v399 = vsel %vm151, %v381, %v387
    %v400 = vsel %vm151, %v385, %v393
    %v401 = vsel %vm151, %v387, %v395
    %v402 = vpack.c.bf16 %v399, %v398
    %v403 = vpack.c.bf16 %v401, %v400
    %v404 = vld [vmem:[#allocation7] sm:$0xf]
    %v405 = vld [vmem:[#allocation7 + $0x4] sm:$0xf]
    %v406 = vld [vmem:[#allocation7 + $0x8] sm:$0xf]
    %v407 = vld [vmem:[#allocation7 + $0xc] sm:$0xf]
    %v408 = vld [vmem:[#allocation7 + $0x10] sm:$0xf]
    %v409 = vld [vmem:[#allocation7 + $0x14] sm:$0xf]
    %v410 = vld [vmem:[#allocation7 + $0x18] sm:$0xf]
    %v411 = vld [vmem:[#allocation7 + $0x1c] sm:$0xf]
    %v412 = vld [vmem:[#allocation7 + $0x20] sm:$0xf]
    %v413 = vld [vmem:[#allocation7 + $0x24] sm:$0xf]
    %v414 = vld [vmem:[#allocation7 + $0x28] sm:$0xf]
    %v415 = vld [vmem:[#allocation7 + $0x2c] sm:$0xf]
    %v416 = vld [vmem:[#allocation7 + $0x30] sm:$0xf]
    %v417 = vld [vmem:[#allocation7 + $0x34] sm:$0xf]
    %v418 = vld [vmem:[#allocation7 + $0x38] sm:$0xf]
    %v419 = vld [vmem:[#allocation7 + $0x3c] sm:$0xf]
    %v420 = vld [vmem:[#allocation7 + $0x40] sm:$0xf]
    %v421 = vld [vmem:[#allocation7 + $0x44] sm:$0xf]
    %v422 = vld [vmem:[#allocation7 + $0x48] sm:$0xf]
    %v423 = vld [vmem:[#allocation7 + $0x4c] sm:$0xf]
    %v424 = vld [vmem:[#allocation7 + $0x50] sm:$0xf]
    %v425 = vld [vmem:[#allocation7 + $0x54] sm:$0xf]
    %v426 = vld [vmem:[#allocation7 + $0x58] sm:$0xf]
    %v427 = vld [vmem:[#allocation7 + $0x5c] sm:$0xf]
    %v428 = vld [vmem:[#allocation7 + $0x60] sm:$0xf]
    %v429 = vld [vmem:[#allocation7 + $0x64] sm:$0xf]
    %v430 = vld [vmem:[#allocation7 + $0x68] sm:$0xf]
    %v431 = vld [vmem:[#allocation7 + $0x6c] sm:$0xf]
    %v432 = vld [vmem:[#allocation7 + $0x70] sm:$0xf]
    %v433 = vld [vmem:[#allocation7 + $0x74] sm:$0xf]
    %v434 = vld [vmem:[#allocation7 + $0x78] sm:$0xf]
    %v435 = vld [vmem:[#allocation7 + $0x7c] sm:$0xf]
    %v436 = vld [vmem:[%s4] sm:$0x1]
    %v438 = vperm.slane %v436, 0
    %v472 = vunpack.c.l.b16 %v404
    %v473 = vunpack.c.l.b16 %v405
    %v474 = vunpack.c.l.b16 %v406
    %v475 = vunpack.c.l.b16 %v407
    %v476 = vunpack.c.l.b16 %v408
    %v477 = vunpack.c.l.b16 %v409
    %v478 = vunpack.c.l.b16 %v410
    %v479 = vunpack.c.l.b16 %v411
    %v480 = vunpack.c.l.b16 %v412
    %v481 = vunpack.c.l.b16 %v413
    %v482 = vunpack.c.l.b16 %v414
    %v483 = vunpack.c.l.b16 %v415
    %v484 = vunpack.c.l.b16 %v416
    %v485 = vunpack.c.l.b16 %v417
    %v486 = vunpack.c.l.b16 %v418
    %v487 = vunpack.c.l.b16 %v419
    %v488 = vunpack.c.l.b16 %v420
    %v489 = vunpack.c.l.b16 %v421
    %v490 = vunpack.c.l.b16 %v422
    %v491 = vunpack.c.l.b16 %v423
    %v492 = vunpack.c.l.b16 %v424
    %v493 = vunpack.c.l.b16 %v425
    %v494 = vunpack.c.l.b16 %v426
    %v495 = vunpack.c.l.b16 %v427
    %v496 = vunpack.c.l.b16 %v428
    %v497 = vunpack.c.l.b16 %v429
    %v498 = vunpack.c.l.b16 %v430
    %v499 = vunpack.c.l.b16 %v431
    %v500 = vunpack.c.l.b16 %v432
    %v501 = vunpack.c.l.b16 %v433
    %v502 = vunpack.c.l.b16 %v434
    %v503 = vunpack.c.l.b16 %v435
    %v504 = vpack.c.b16 %v473, %v472
    %v505 = vpack.c.b16 %v475, %v474
    %v506 = vpack.c.b16 %v477, %v476
    %v507 = vpack.c.b16 %v479, %v478
    %v508 = vpack.c.b16 %v481, %v480
    %v509 = vpack.c.b16 %v483, %v482
    %v510 = vpack.c.b16 %v485, %v484
    %v511 = vpack.c.b16 %v487, %v486
    %v512 = vpack.c.b16 %v489, %v488
    %v513 = vpack.c.b16 %v491, %v490
    %v514 = vpack.c.b16 %v493, %v492
    %v515 = vpack.c.b16 %v495, %v494
    %v516 = vpack.c.b16 %v497, %v496
    %v517 = vpack.c.b16 %v499, %v498
    %v518 = vpack.c.b16 %v501, %v500
    %v519 = vpack.c.b16 %v503, %v502
    %536 = vmatpush.bf16.msra.mxu0 %v511
    %537 = vmatpush.bf16.msra.mxu0 %v510
    %538 = vmatpush.bf16.msra.mxu0 %v509
    %539 = vmatpush.bf16.msra.mxu0 %v508
    %540 = vmatpush.bf16.msra.mxu0 %v507
    %541 = vmatpush.bf16.msra.mxu0 %v506
    %542 = vmatpush.bf16.msra.mxu0 %v505
    %543 = vmatpush.bf16.msra.mxu0 %v504
    %544 = vmatmul.bf16.gmra.mxu0 %v402
    %v545 = vpop.f32.mrf.mxu0
    %v546 = vadd.f32 %v438, %v545
    %v547 = vpop.f32.mrf.mxu0
    %v548 = vadd.f32 %v438, %v547
    %549 = vdwg.mxu0
    %550 = vmatpush.bf16.msra.mxu0 %v519
    %551 = vmatpush.bf16.msra.mxu0 %v518
    %552 = vmatpush.bf16.msra.mxu0 %v517
    %553 = vmatpush.bf16.msra.mxu0 %v516
    %554 = vmatpush.bf16.msra.mxu0 %v515
    %555 = vmatpush.bf16.msra.mxu0 %v514
    %556 = vmatpush.bf16.msra.mxu0 %v513
    %557 = vmatpush.bf16.msra.mxu0 %v512
    %558 = vmatmul.bf16.gmra.mxu0 %v403
    %v559 = vpop.f32.mrf.mxu0
    %v560 = vadd.f32 %v546, %v559
    %v561 = vpop.f32.mrf.mxu0
    %v562 = vadd.f32 %v548, %v561
    %563 = vdwg.mxu0
    %v564 = vadd.f32 %v560, %v68
    %v565 = vadd.f32 %v562, %v69
    %v566 = vxor.u32 %v564, 2147483648
    %v567 = vxor.u32 %v565, 2147483648
    %v568 = vmul.f32 %v566, 1.442695
    %v569 = vpow.pop %v568
    %v570 = vmul.f32 %v567, 1.442695
    %v571 = vpow.pop %v570
    %v572 = vadd.f32 %v569, 1.0
    %v573 = vadd.f32 %v571, 1.0
    %v574 = vrcp.pop %v572
    %v575 = vmul.f32 %v572, %v574
    %v576 = vsub.f32 1.0, %v575
    %v577 = vmul.f32 %v574, %v576
    %v578 = vadd.f32 %v574, %v577
    %vm579 = vweird.f32 %v572
    %vm580 = vweird.f32 %v574
    %vm581 = vmor %vm579, %vm580
    %v582 = vsel %vm581, %v574, %v578
    %v583 = vand.u32 2147483647, %v572
    %vm584 = vcmp.eq.f32.partialorder %v583, 8.507059e+37
    %v585 = vand.u32 %v572, 2147483648
    %v586 = vor.u32 1.1754944e-38, %v585
    %v587 = vsel %vm584, %v586, %v582
    %v588 = vmul.f32 1.0, %v587
    %v589 = vrcp.pop %v573
    %v590 = vmul.f32 %v573, %v589
    %v591 = vsub.f32 1.0, %v590
    %v592 = vmul.f32 %v589, %v591
    %v593 = vadd.f32 %v589, %v592
    %vm594 = vweird.f32 %v573
    %vm595 = vweird.f32 %v589
    %vm596 = vmor %vm594, %vm595
    %v597 = vsel %vm596, %v589, %v593
    %v598 = vand.u32 2147483647, %v573
    %vm599 = vcmp.eq.f32.partialorder %v598, 8.507059e+37
    %v600 = vand.u32 %v573, 2147483648
    %v601 = vor.u32 1.1754944e-38, %v600
    %v602 = vsel %vm599, %v601, %v597
    %v603 = vmul.f32 1.0, %v602
    %v604 = vmul.f32 %v564, %v588
    %v605 = vmul.f32 %v565, %v603
    %606 = vst [vmem:[#allocation8] sm:$0xff] %v604
    %607 = vst [vmem:[#allocation8 + $0x8] sm:$0xff] %v605
    // Predicated region
    $region34: #{tpu_custom_call.1} parent=1 // pred_check
      _
    $region35: #{tpu_custom_call.1} parent=1 // pred_check_branch
      %609 = sbr.rel (0) target = $region37
    $region36: #{tpu_custom_call.1} parent=1 // pred_region
      %611 = vsyncadd [#allocation4], 0
      %s612 = sshll.u32 [#allocation8], 4
      %s613 = int_to_ptr.vmem [resolvable:$true] %s612
      %s614 = sshll.u32 %s5, 4
      %s615 = int_to_ptr.hbm [resolvable:$true] %s614
      %620 = dma.vmem_to_hbm [thread:$0]  %s613, 256, %s615, [#allocation4], 128, 128, 8
    $region37: #{tpu_custom_call.1} parent=1 // pred_fallthru
      _
    // Predicated region
    $region38: #{tpu_custom_call.1} parent=1 // pred_check
      _
    $region39: #{tpu_custom_call.1} parent=1 // pred_check_branch
      %622 = sbr.rel (0) target = $region41
    $region40: #{tpu_custom_call.1} parent=1 // pred_region
      %624 = dma.done [#allocation4], 256
    $region41: #{tpu_custom_call.1} parent=1 // pred_fallthru
      _
    %625 = vsyncpa [#allocation3], 1
    %626 = vsyncpa [#allocation6], 1
    %627 = vsyncpa [#allocation4], 1

</llo_original>
